<compile_context>
chip_gen: v6e
topology: v6e:2x2x1
jax: 0.10.0
libtpu: 0.0.40
codegen_flags: <defaults>
</compile_context>

<pallas_src>
import functools

import jax
import jax.numpy as jnp
from jax import lax
from jax.experimental import pallas as pl
from jax.experimental.pallas import tpu as pltpu


def _round_up(x, m):
    return (x + m - 1) // m * m


def mlp_kernel(x_ref, w1_ref, w2_ref, w3_ref, shifts_ref, o_ref, *,
               sub_b, d1p, d2p, d_out):
    block_b = x_ref.shape[0]
    n_sub = block_b // sub_b

    # Hoisted once per grid step: folded BN shifts + output bias (f32).
    shifts = shifts_ref[...]                  # (3, Wmax) f32
    t1 = shifts[0:1, :d1p]                    # bn1 shift (fc1 bias folded in)
    t2 = shifts[1:2, :d2p]                    # bn2 shift (fc2 bias folded in)
    b3 = shifts[2:3, :d_out]                  # out-layer bias

    def body(s, carry):
        r0 = pl.multiple_of(s * sub_b, sub_b)
        xb = x_ref[pl.ds(r0, sub_b), :]
        # fc1 (+ folded bn1) + relu        (dropout1 = identity in eval)
        h = jnp.dot(xb, w1_ref[...], preferred_element_type=jnp.float32)
        h = jnp.maximum(h + t1, 0.0)
        # fc2 (+ folded bn2) + relu        (dropout2 = identity in eval)
        h = jnp.dot(h.astype(jnp.bfloat16), w2_ref[...],
                    preferred_element_type=jnp.float32)
        h = jnp.maximum(h + t2, 0.0)
        # output linear; slice the MXU-padded columns down to the real d_out
        y = jnp.dot(h.astype(jnp.bfloat16), w3_ref[...],
                    preferred_element_type=jnp.float32)
        o_ref[pl.ds(r0, sub_b), :] = y[:, :d_out] + b3
        return carry

    lax.fori_loop(0, n_sub, body, 0, unroll=True)


def fold_bn_into_linear(w_t, bias, gamma, beta, mean, var, eps=1e-5):
    """Fold Linear bias + eval-mode BatchNorm1d into the weight and a shift.

    w_t: (in, out) weight (torch weight transposed).  y = x @ w_folded + shift.
    NOTE: if running_var is very small, scale can be large and lose precision
    when the folded weight is later cast to bf16.
    """
    scale = gamma / jnp.sqrt(var + eps)
    return w_t * scale[None, :], beta + (bias - mean) * scale


def mlp_forward(x, w1, t1, w2, t2, w3, b3, *, block_b=2048):
    B, in_dim = x.shape
    d1 = w1.shape[1]
    d2 = w2.shape[1]
    d_out = w3.shape[1]

    # ---- pad hidden/MXU-N dims to full 128-lane width (zero cols/rows) ------
    d1p = _round_up(d1, 128)
    d2p = _round_up(d2, 128)
    dop = _round_up(d_out, 128)          # MXU N width only; never stored to HBM
    wmax = max(d1p, d2p)

    w1p = jnp.pad(w1, ((0, 0), (0, d1p - d1)))
    w2p = jnp.pad(w2, ((0, d1p - d1), (0, d2p - d2)))
    w3p = jnp.pad(w3, ((0, d2p - d2), (0, dop - d_out)))
    shifts = jnp.stack([
        jnp.pad(t1.astype(jnp.float32), (0, wmax - d1)),
        jnp.pad(t2.astype(jnp.float32), (0, wmax - d2)),
        jnp.pad(b3.astype(jnp.float32), (0, wmax - d_out)),
    ])                                    # (3, wmax) f32: [shift1; shift2; b3]

    # ---- batch tiling: large tiles, >=2 parallel grid steps when possible ---
    steps = max(1, (B + block_b - 1) // block_b)
    if steps == 1 and B >= 32:
        steps = 2                         # keep both v7x TensorCores busy
    block_b = _round_up(max(1, (B + steps - 1) // steps), 16)  # bf16 sublanes
    if block_b > 256:
        # in-kernel sub-tile size bounding f32 live ranges (vreg pressure)
        sub_b = next(c for c in (256, 128, 64, 32, 16) if block_b % c == 0)
    else:
        sub_b = block_b
    B_pad = steps * block_b
    if B_pad != B:
        x = jnp.pad(x, ((0, B_pad - B), (0, 0)))

    # ---- bf16 MXU operands (f32 accumulation + f32 affine/relu in-kernel) ---
    x_bf = x.astype(jnp.bfloat16)
    w1_bf = w1p.astype(jnp.bfloat16)
    w2_bf = w2p.astype(jnp.bfloat16)
    w3_bf = w3p.astype(jnp.bfloat16)

    # Honest scheduling hint (real output width, no dead padded columns).
    flops = 2 * B_pad * (in_dim * d1 + d1 * d2 + d2 * d_out)
    bytes_accessed = (x_bf.size * 2
                      + (w1_bf.size + w2_bf.size + w3_bf.size) * 2
                      + shifts.size * 4
                      + B_pad * d_out * 4)
    cost = pl.CostEstimate(flops=flops, transcendentals=0,
                           bytes_accessed=bytes_accessed)

    def const_spec(shape):
        # Constant-index operands: resident once, single-buffered.
        index_map = lambda i: (0,) * len(shape)
        try:
            return pl.BlockSpec(shape, index_map,
                                pipeline_mode=pl.Buffered(1))
        except (AttributeError, TypeError):
            # older pallas without pipeline_mode / Buffered: plain spec
            return pl.BlockSpec(shape, index_map)

    kernel = functools.partial(mlp_kernel, sub_b=sub_b, d1p=d1p, d2p=d2p,
                               d_out=d_out)

    out = pl.pallas_call(
        kernel,
        out_shape=jax.ShapeDtypeStruct((B_pad, d_out), jnp.float32),
        grid_spec=pltpu.PrefetchScalarGridSpec(
            num_scalar_prefetch=0,
            grid=(steps,),
            in_specs=[
                pl.BlockSpec((block_b, in_dim), lambda i: (i, 0)),  # x tile
                const_spec((in_dim, d1p)),     # W1 (bn1 scale folded)
                const_spec((d1p, d2p)),        # W2 (bn2 scale folded)
                const_spec((d2p, dop)),        # W3 (out layer, N padded)
                const_spec((3, wmax)),         # [shift1; shift2; b3]
            ],
            out_specs=pl.BlockSpec((block_b, d_out), lambda i: (i, 0)),
        ),
        compiler_params=pltpu.CompilerParams(
            dimension_semantics=("parallel",)),
        cost_estimate=cost,
    )(x_bf, w1_bf, w2_bf, w3_bf, shifts)

    return out[:B]


def reference_eval(x, w1_pt, b1_pt, bn1, w2_pt, b2_pt, bn2, w3_pt, b3_pt,
                   eps=1e-5):
    """Pure-JAX f32 emulation of the PyTorch MLP_out.eval() forward."""
    g1, be1, rm1, rv1 = bn1
    g2, be2, rm2, rv2 = bn2
    h = x @ w1_pt.T + b1_pt
    h = (h - rm1) / jnp.sqrt(rv1 + eps) * g1 + be1
    h = jnp.maximum(h, 0.0)
    h = h @ w2_pt.T + b2_pt
    h = (h - rm2) / jnp.sqrt(rv2 + eps) * g2 + be2
    h = jnp.maximum(h, 0.0)
    return h @ w3_pt.T + b3_pt


if __name__ == "__main__":
    # Shapes consistent with the module: input_dim=32, dim1=128, dim2=64, out=2.
    IN, D1, D2, DOUT = 32, 128, 64, 2
    key = jax.random.PRNGKey(0)
    ks = jax.random.split(key, 16)

    # nn.Linear-style params: weight (out, in), bias (out,).
    w1_pt = jax.random.normal(ks[1], (D1, IN), jnp.float32) / jnp.sqrt(IN)
    b1_pt = jax.random.normal(ks[2], (D1,), jnp.float32) * 0.01
    w2_pt = jax.random.normal(ks[3], (D2, D1), jnp.float32) / jnp.sqrt(D1)
    b2_pt = jax.random.normal(ks[4], (D2,), jnp.float32) * 0.01
    w3_pt = jax.random.normal(ks[5], (DOUT, D2), jnp.float32) / jnp.sqrt(D2)
    b3_pt = jax.random.normal(ks[6], (DOUT,), jnp.float32) * 0.01

    # Non-trivial BatchNorm1d params / running stats (eval mode).
    g1 = 1.0 + 0.1 * jax.random.normal(ks[7], (D1,), jnp.float32)
    be1 = 0.05 * jax.random.normal(ks[8], (D1,), jnp.float32)
    rm1 = 0.1 * jax.random.normal(ks[9], (D1,), jnp.float32)
    rv1 = jax.random.uniform(ks[10], (D1,), jnp.float32, 0.5, 1.5)
    g2 = 1.0 + 0.1 * jax.random.normal(ks[11], (D2,), jnp.float32)
    be2 = 0.05 * jax.random.normal(ks[12], (D2,), jnp.float32)
    rm2 = 0.1 * jax.random.normal(ks[13], (D2,), jnp.float32)
    rv2 = jax.random.uniform(ks[14], (D2,), jnp.float32, 0.5, 1.5)

    # Fold Linear bias + BN(eval) into weights/shifts (one-time offline).
    w1f, t1 = fold_bn_into_linear(w1_pt.T, b1_pt, g1, be1, rm1, rv1)
    w2f, t2 = fold_bn_into_linear(w2_pt.T, b2_pt, g2, be2, rm2, rv2)
    w3f, b3 = w3_pt.T, b3_pt

    # B=16: single grid step, single sub-tile.
    # B=1024: 2 parallel grid steps x 2 in-kernel 256-row sub-tiles.
    for B in (16, 1024):
        x = jax.random.normal(ks[0], (B, IN), dtype=jnp.float32)
        out = jax.block_until_ready(mlp_forward(x, w1f, t1, w2f, t2, w3f, b3))
        ref = reference_eval(x, w1_pt, b1_pt, (g1, be1, rm1, rv1),
                             w2_pt, b2_pt, (g2, be2, rm2, rv2), w3_pt, b3_pt)
        assert out.shape == (B, DOUT)
        # bf16 matmul operands (f32 accumulation) -> loosened tolerance vs f32.
        assert jnp.allclose(out, ref, atol=1e-1, rtol=1e-1), (
            f"B={B}: mismatch vs reference, "
            f"max abs err={jnp.max(jnp.abs(out - ref))}")
    print("KERNEL_OK")
</pallas_src>

<mosaic_0001>
module attributes {stable_mosaic.version = 11 : i64} {
  func.func @mlp_kernel(%arg0: i32, %arg1: memref<16x32xbf16, #tpu.memory_space<vmem>>, %arg2: memref<32x128xbf16, #tpu.memory_space<vmem>>, %arg3: memref<128x128xbf16, #tpu.memory_space<vmem>>, %arg4: memref<128x128xbf16, #tpu.memory_space<vmem>>, %arg5: memref<3x128xf32, #tpu.memory_space<vmem>>, %arg6: memref<16x2xf32, #tpu.memory_space<vmem>>) attributes {dimension_semantics = [#tpu.dimension_semantics<parallel>], iteration_bounds = array<i64: 1>, scalar_prefetch = 0 : i64, scratch_operands = 0 : i64, tpu.core_type = #tpu.core_type<tc>, window_params = [{transform_indices = @transform_0, window_bounds = array<i64: 16, 32>}, {pipeline_mode = #tpu.pipeline_mode<synchronous>, transform_indices = @transform_1, window_bounds = array<i64: 32, 128>}, {pipeline_mode = #tpu.pipeline_mode<synchronous>, transform_indices = @transform_2, window_bounds = array<i64: 128, 128>}, {pipeline_mode = #tpu.pipeline_mode<synchronous>, transform_indices = @transform_3, window_bounds = array<i64: 128, 128>}, {pipeline_mode = #tpu.pipeline_mode<synchronous>, transform_indices = @transform_4, window_bounds = array<i64: 3, 128>}, {transform_indices = @transform_5, window_bounds = array<i64: 16, 2>}]} {
    %c0 = arith.constant 0 : index
    %c0_0 = arith.constant 0 : index
    %0 = vector.load %arg5[%c0, %c0_0] : memref<3x128xf32, #tpu.memory_space<vmem>>, vector<3x128xf32>
    %1 = vector.extract_strided_slice %0 {offsets = [0, 0], sizes = [1, 128], strides = [1, 1]} : vector<3x128xf32> to vector<1x128xf32>
    %2 = vector.extract_strided_slice %0 {offsets = [1, 0], sizes = [1, 128], strides = [1, 1]} : vector<3x128xf32> to vector<1x128xf32>
    %3 = vector.extract_strided_slice %0 {offsets = [2, 0], sizes = [1, 2], strides = [1, 1]} : vector<3x128xf32> to vector<1x2xf32>
    %c0_i32 = arith.constant 0 : i32
    %c16_i32 = arith.constant 16 : i32
    %4 = arith.muli %c0_i32, %c16_i32 : i32
    %5 = tpu.assume_multiple %4, 16 : i32
    %6 = arith.index_cast %5 : i32 to index
    %c0_1 = arith.constant 0 : index
    %7 = vector.load %arg1[%6, %c0_1] : memref<16x32xbf16, #tpu.memory_space<vmem>>, vector<16x32xbf16>
    %c0_2 = arith.constant 0 : index
    %c0_3 = arith.constant 0 : index
    %8 = vector.load %arg2[%c0_2, %c0_3] : memref<32x128xbf16, #tpu.memory_space<vmem>>, vector<32x128xbf16>
    %cst = arith.constant dense<0.000000e+00> : vector<16x128xf32>
    %9 = tpu.matmul %7, %8, %cst {dimension_numbers = #tpu.dot_dimension_numbers<[1], [0], [0], [1], [0, 0, 1, 1], [], []>} : vector<16x32xbf16>, vector<32x128xbf16>, vector<16x128xf32> -> vector<16x128xf32>
    %10 = vector.broadcast %1 : vector<1x128xf32> to vector<16x128xf32>
    %11 = arith.addf %9, %10 : vector<16x128xf32>
    %cst_4 = arith.constant 0.000000e+00 : f32
    %12 = vector.broadcast %cst_4 : f32 to vector<16x128xf32>
    %13 = arith.maximumf %11, %12 : vector<16x128xf32>
    %14 = arith.truncf %13 : vector<16x128xf32> to vector<16x128xbf16>
    %c0_5 = arith.constant 0 : index
    %c0_6 = arith.constant 0 : index
    %15 = vector.load %arg3[%c0_5, %c0_6] : memref<128x128xbf16, #tpu.memory_space<vmem>>, vector<128x128xbf16>
    %cst_7 = arith.constant dense<0.000000e+00> : vector<16x128xf32>
    %16 = tpu.matmul %14, %15, %cst_7 {dimension_numbers = #tpu.dot_dimension_numbers<[1], [0], [0], [1], [0, 0, 1, 1], [], []>} : vector<16x128xbf16>, vector<128x128xbf16>, vector<16x128xf32> -> vector<16x128xf32>
    %17 = vector.broadcast %2 : vector<1x128xf32> to vector<16x128xf32>
    %18 = arith.addf %16, %17 : vector<16x128xf32>
    %cst_8 = arith.constant 0.000000e+00 : f32
    %19 = vector.broadcast %cst_8 : f32 to vector<16x128xf32>
    %20 = arith.maximumf %18, %19 : vector<16x128xf32>
    %21 = arith.truncf %20 : vector<16x128xf32> to vector<16x128xbf16>
    %c0_9 = arith.constant 0 : index
    %c0_10 = arith.constant 0 : index
    %22 = vector.load %arg4[%c0_9, %c0_10] : memref<128x128xbf16, #tpu.memory_space<vmem>>, vector<128x128xbf16>
    %cst_11 = arith.constant dense<0.000000e+00> : vector<16x128xf32>
    %23 = tpu.matmul %21, %22, %cst_11 {dimension_numbers = #tpu.dot_dimension_numbers<[1], [0], [0], [1], [0, 0, 1, 1], [], []>} : vector<16x128xbf16>, vector<128x128xbf16>, vector<16x128xf32> -> vector<16x128xf32>
    %24 = vector.extract_strided_slice %23 {offsets = [0, 0], sizes = [16, 2], strides = [1, 1]} : vector<16x128xf32> to vector<16x2xf32>
    %25 = vector.broadcast %3 : vector<1x2xf32> to vector<16x2xf32>
    %26 = arith.addf %24, %25 : vector<16x2xf32>
    %27 = arith.index_cast %5 : i32 to index
    %c0_12 = arith.constant 0 : index
    %28 = vector.load %arg6[%27, %c0_12] : memref<16x2xf32, #tpu.memory_space<vmem>>, vector<16x2xf32>
    tpu.vector_store %arg6[%27, %c0_12], %26 {strides = array<i32>} : memref<16x2xf32, #tpu.memory_space<vmem>>, vector<16x2xf32>,
    %c1_i32 = arith.constant 1 : i32
    return
  }
  func.func @transform_0(%arg0: i32) -> (i32, i32) {
    %c0_i32 = arith.constant 0 : i32
    %c0_i32_0 = arith.constant 0 : i32
    return %arg0, %c0_i32 : i32, i32
  }
  func.func @transform_1(%arg0: i32) -> (i32, i32) {
    %c0_i32 = arith.constant 0 : i32
    %c0_i32_0 = arith.constant 0 : i32
    %c0_i32_1 = arith.constant 0 : i32
    return %c0_i32, %c0_i32_0 : i32, i32
  }
  func.func @transform_2(%arg0: i32) -> (i32, i32) {
    %c0_i32 = arith.constant 0 : i32
    %c0_i32_0 = arith.constant 0 : i32
    %c0_i32_1 = arith.constant 0 : i32
    return %c0_i32, %c0_i32_0 : i32, i32
  }
  func.func @transform_3(%arg0: i32) -> (i32, i32) {
    %c0_i32 = arith.constant 0 : i32
    %c0_i32_0 = arith.constant 0 : i32
    %c0_i32_1 = arith.constant 0 : i32
    return %c0_i32, %c0_i32_0 : i32, i32
  }
  func.func @transform_4(%arg0: i32) -> (i32, i32) {
    %c0_i32 = arith.constant 0 : i32
    %c0_i32_0 = arith.constant 0 : i32
    %c0_i32_1 = arith.constant 0 : i32
    return %c0_i32, %c0_i32_0 : i32, i32
  }
  func.func @transform_5(%arg0: i32) -> (i32, i32) {
    %c0_i32 = arith.constant 0 : i32
    %c0_i32_0 = arith.constant 0 : i32
    return %arg0, %c0_i32 : i32, i32
  }
}

</mosaic_0001>

<llo_original>
// kernel: tpu_custom_call.1
$region0: #{tpu_custom_call.1}
  #allocation0 [shape = 'u32[]', space=smem, size = 0x4, offset = 0x4, fixed_abs, tag = 'smem constant byte address 0x4 - core index']
  #allocation1 [shape = 'u32[144,128]{1,0:T(1,128)}', space=vmem, size = 0x12000, scoped, tag = 'internal scratch']
  %s0 = inlined_call_operand.hbm [shape: bf16[16,32], index: 0, kind: input, shape index: {}]
  %s1 = inlined_call_operand.hbm [shape: bf16[32,128], index: 1, kind: input, shape index: {}]
  %s2 = inlined_call_operand.hbm [shape: bf16[128,128], index: 2, kind: input, shape index: {}]
  %s3 = inlined_call_operand.hbm [shape: bf16[128,128], index: 3, kind: input, shape index: {}]
  %s4 = inlined_call_operand.vmem [shape: f32[3,128], index: 4, kind: input, shape index: {}]
  %s5 = inlined_call_operand.vmem [shape: f32[16,2], index: 5, kind: output, shape index: {}]
  %s6 = sld [smem:[#allocation0]]
  $region46: #{tpu_custom_call.1} parent=0
    _
  %s8 = ssub.s32 1, %s6
  %s9 = scalar_select 0, %s8, %s6
  $region1: #{tpu_custom_call.1} parent=0
    #allocation2 [shape = 'u8[4096]{0}', space=vmem, size = 0x1000, scoped, tag = 'input window, operand 0, single buffered']
    #allocation3 [shape = 's32[1]{0}', space=sflag, size = 0x4, scoped, tag = 'scoped memory for tpu_custom_call.1']
    #allocation4 [shape = 'u8[8192]{0}', space=vmem, size = 0x2000, scoped, tag = 'input window, operand 1, single buffered']
    #allocation5 [shape = 's32[1]{0}', space=sflag, size = 0x4, scoped, tag = 'scoped memory for tpu_custom_call.1']
    #allocation6 [shape = 'u8[32768]{0}', space=vmem, size = 0x8000, scoped, tag = 'input window, operand 2, single buffered']
    #allocation7 [shape = 'u8[32768]{0}', space=vmem, size = 0x8000, scoped, tag = 'input window, operand 3, single buffered']
    #allocation8 [shape = 's32[1]{0}', space=sflag, size = 0x4, scoped, tag = 'scoped memory for tpu_custom_call.1']
    %10 = vsyncpa [#allocation3], 0
    %11 = vsyncpa [#allocation5], 0
    %12 = vsyncpa [#allocation8], 0
    // Predicated region
    $region2: #{tpu_custom_call.1} parent=1 // pred_check
      _
    $region3: #{tpu_custom_call.1} parent=1 // pred_check_branch
      %14 = sbr.rel (0) target = $region5
    $region4: #{tpu_custom_call.1} parent=1 // pred_region
      %s16 = ssub.s32 128, 128
      %17 = vsyncadd [#allocation3], %s16
      %s18 = sshll.u32 [#allocation2], 4
      %s19 = int_to_ptr.vmem [resolvable:$true] %s18
      %24 = dma.hbm_to_vmem [thread:$0]  %s0, 128, %s19, [#allocation3], 64, 64, 4
    $region5: #{tpu_custom_call.1} parent=1 // pred_fallthru
      _
    // Predicated region
    $region6: #{tpu_custom_call.1} parent=1 // pred_check
      _
    $region7: #{tpu_custom_call.1} parent=1 // pred_check_branch
      %26 = sbr.rel (0) target = $region9
    $region8: #{tpu_custom_call.1} parent=1 // pred_region
      %s28 = ssub.s32 256, 256
      %29 = vsyncadd [#allocation5], %s28
      %s30 = sshll.u32 [#allocation4], 4
      %s31 = int_to_ptr.vmem [resolvable:$true] %s30
      %36 = dma.hbm_to_vmem [thread:$0]  %s1, 256, %s31, [#allocation5], 64, 64, 4
    $region9: #{tpu_custom_call.1} parent=1 // pred_fallthru
      _
    // Predicated region
    $region10: #{tpu_custom_call.1} parent=1 // pred_check
      _
    $region11: #{tpu_custom_call.1} parent=1 // pred_check_branch
      %38 = sbr.rel (0) target = $region13
    $region12: #{tpu_custom_call.1} parent=1 // pred_region
      %s40 = ssub.s32 1024, 1024
      %41 = vsyncadd [#allocation5], %s40
      %s42 = sshll.u32 [#allocation6], 4
      %s43 = int_to_ptr.vmem [resolvable:$true] %s42
      %48 = dma.hbm_to_vmem [thread:$0]  %s2, 1024, %s43, [#allocation5], 64, 64, 4
    $region13: #{tpu_custom_call.1} parent=1 // pred_fallthru
      _
    // Predicated region
    $region14: #{tpu_custom_call.1} parent=1 // pred_check
      _
    $region15: #{tpu_custom_call.1} parent=1 // pred_check_branch
      %50 = sbr.rel (0) target = $region17
    $region16: #{tpu_custom_call.1} parent=1 // pred_region
      %s52 = ssub.s32 1024, 1024
      %53 = vsyncadd [#allocation8], %s52
      %s54 = sshll.u32 [#allocation7], 4
      %s55 = int_to_ptr.vmem [resolvable:$true] %s54
      %60 = dma.hbm_to_vmem [thread:$0]  %s3, 1024, %s55, [#allocation8], 64, 64, 4
    $region17: #{tpu_custom_call.1} parent=1 // pred_fallthru
      _
    // Predicated region
    $region18: #{tpu_custom_call.1} parent=1 // pred_check
      _
    $region19: #{tpu_custom_call.1} parent=1 // pred_check_branch
      %62 = sbr.rel (0) target = $region21
    $region20: #{tpu_custom_call.1} parent=1 // pred_region
      _
    $region21: #{tpu_custom_call.1} parent=1 // pred_fallthru
      _
    // Predicated region
    $region22: #{tpu_custom_call.1} parent=1 // pred_check
      _
    $region23: #{tpu_custom_call.1} parent=1 // pred_check_branch
      %64 = sbr.rel (0) target = $region25
    $region24: #{tpu_custom_call.1} parent=1 // pred_region
      %65 = dma.done [#allocation3], 128
    $region25: #{tpu_custom_call.1} parent=1 // pred_fallthru
      _
    // Predicated region
    $region26: #{tpu_custom_call.1} parent=1 // pred_check
      _
    $region27: #{tpu_custom_call.1} parent=1 // pred_check_branch
      %67 = sbr.rel (0) target = $region29
    $region28: #{tpu_custom_call.1} parent=1 // pred_region
      %68 = dma.done [#allocation5], 256
    $region29: #{tpu_custom_call.1} parent=1 // pred_fallthru
      _
    // Predicated region
    $region30: #{tpu_custom_call.1} parent=1 // pred_check
      _
    $region31: #{tpu_custom_call.1} parent=1 // pred_check_branch
      %70 = sbr.rel (0) target = $region33
    $region32: #{tpu_custom_call.1} parent=1 // pred_region
      %71 = dma.done [#allocation5], 1024
    $region33: #{tpu_custom_call.1} parent=1 // pred_fallthru
      _
    // Predicated region
    $region34: #{tpu_custom_call.1} parent=1 // pred_check
      _
    $region35: #{tpu_custom_call.1} parent=1 // pred_check_branch
      %73 = sbr.rel (0) target = $region37
    $region36: #{tpu_custom_call.1} parent=1 // pred_region
      %74 = dma.done [#allocation8], 1024
    $region37: #{tpu_custom_call.1} parent=1 // pred_fallthru
      _
    %v76 = vld [vmem:[%s4] sm:$0x7]
    %v77 = vld [vmem:[#allocation2] sm:$0xf]
    %v78 = vld [vmem:[#allocation2 + $0x4] sm:$0xf]
    %v79 = vld [vmem:[#allocation4] sm:$0xf]
    %v80 = vld [vmem:[#allocation4 + $0x4] sm:$0xf]
    %v81 = vld [vmem:[#allocation4 + $0x8] sm:$0xf]
    %v82 = vld [vmem:[#allocation4 + $0xc] sm:$0xf]
    %v83 = vlaneseq
    %v84 = vshrl.u32 %v83, 7
    %v85 = vsub.s32 0, %v84
    %v86 = vrot.slane %v76, %v85
    %v89 = vunpack.c.l.b16 %v77
    %v90 = vunpack.c.l.b16 %v78
    %v91 = vpack.c.b16 %v90, %v89
    %v96 = vunpack.c.l.b16 %v79
    %v97 = vunpack.c.l.b16 %v80
    %v98 = vunpack.c.l.b16 %v81
    %v99 = vunpack.c.l.b16 %v82
    %v100 = vpack.c.b16 %v97, %v96
    %v101 = vpack.c.b16 %v99, %v98
    %vm104 = vcmask 261120
    %v106 = vsel %vm104, %v91, 0
    %108 = vmatprep.subr.bf16.mxu0 0
    %109 = vmatpush1.bf16.msra.mxu0 0
    %110 = vmatprep.subr.bf16.mxu0 0
    %111 = vmatpush1.bf16.msra.mxu0 0
    %112 = vmatprep.subr.bf16.mxu0 0
    %113 = vmatpush1.bf16.msra.mxu0 0
    %114 = vmatprep.subr.bf16.mxu0 0
    %115 = vmatpush1.bf16.msra.mxu0 0
    %116 = vmatprep.subr.bf16.mxu0 0
    %117 = vmatpush1.bf16.msra.mxu0 0
    %118 = vmatprep.subr.bf16.mxu0 0
    %119 = vmatpush1.bf16.msra.mxu0 0
    %120 = vmatprep.subr.bf16.mxu0 0
    %121 = vmatpush1.bf16.msra.mxu0 %v101
    %122 = vmatprep.subr.bf16.mxu0 0
    %123 = vmatpush1.bf16.msra.mxu0 %v100
    %124 = vmatprep.subr.bf16.mxu0 0
    %125 = vmatpush2.bf16.msra.mxu0 0
    %126 = vmatprep.subr.bf16.mxu0 0
    %127 = vmatpush2.bf16.msra.mxu0 0
    %128 = vmatprep.subr.bf16.mxu0 0
    %129 = vmatpush2.bf16.msra.mxu0 0
    %130 = vmatprep.subr.bf16.mxu0 0
    %131 = vmatpush2.bf16.msra.mxu0 0
    %132 = vmatprep.subr.bf16.mxu0 0
    %133 = vmatpush2.bf16.msra.mxu0 0
    %134 = vmatprep.subr.bf16.mxu0 0
    %135 = vmatpush2.bf16.msra.mxu0 0
    %136 = vmatprep.subr.bf16.mxu0 0
    %137 = vmatpush2.bf16.msra.mxu0 0
    %138 = vmatprep.subr.bf16.mxu0 0
    %139 = vmatpush2.bf16.msra.mxu0 0
    %140 = vmatprep.mubr.bf16.mxu0 0
    %141 = vmatmul.mubr.bf16.gmra.mxu0 %v106
    %v142 = vpop.f32.mrf.mxu0
    %v143 = vadd.f32 %v86, %v142
    %v144 = vpop.f32.mrf.mxu0
    %v145 = vpop.f32.mrf.mxu0
    %v146 = vadd.f32 %v86, %v145
    %v147 = vpop.f32.mrf.mxu0
    %148 = vdwg.mxu0
    %v149 = vmax.f32 %v143, 0.0
    %v150 = vmax.f32 %v146, 0.0
    %v151 = vpack.c.bf16 %v150, %v149
    %v152 = vld [vmem:[#allocation6] sm:$0xf]
    %v153 = vld [vmem:[#allocation6 + $0x4] sm:$0xf]
    %v154 = vld [vmem:[#allocation6 + $0x8] sm:$0xf]
    %v155 = vld [vmem:[#allocation6 + $0xc] sm:$0xf]
    %v156 = vld [vmem:[#allocation6 + $0x10] sm:$0xf]
    %v157 = vld [vmem:[#allocation6 + $0x14] sm:$0xf]
    %v158 = vld [vmem:[#allocation6 + $0x18] sm:$0xf]
    %v159 = vld [vmem:[#allocation6 + $0x1c] sm:$0xf]
    %v160 = vld [vmem:[#allocation6 + $0x20] sm:$0xf]
    %v161 = vld [vmem:[#allocation6 + $0x24] sm:$0xf]
    %v162 = vld [vmem:[#allocation6 + $0x28] sm:$0xf]
    %v163 = vld [vmem:[#allocation6 + $0x2c] sm:$0xf]
    %v164 = vld [vmem:[#allocation6 + $0x30] sm:$0xf]
    %v165 = vld [vmem:[#allocation6 + $0x34] sm:$0xf]
    %v166 = vld [vmem:[#allocation6 + $0x38] sm:$0xf]
    %v167 = vld [vmem:[#allocation6 + $0x3c] sm:$0xf]
    %v168 = vlaneseq
    %v169 = vshrl.u32 %v168, 7
    %v170 = vsub.s32 1, %v169
    %v171 = vrot.slane %v76, %v170
    %v188 = vunpack.c.l.b16 %v152
    %v189 = vunpack.c.l.b16 %v153
    %v190 = vunpack.c.l.b16 %v154
    %v191 = vunpack.c.l.b16 %v155
    %v192 = vunpack.c.l.b16 %v156
    %v193 = vunpack.c.l.b16 %v157
    %v194 = vunpack.c.l.b16 %v158
    %v195 = vunpack.c.l.b16 %v159
    %v196 = vunpack.c.l.b16 %v160
    %v197 = vunpack.c.l.b16 %v161
    %v198 = vunpack.c.l.b16 %v162
    %v199 = vunpack.c.l.b16 %v163
    %v200 = vunpack.c.l.b16 %v164
    %v201 = vunpack.c.l.b16 %v165
    %v202 = vunpack.c.l.b16 %v166
    %v203 = vunpack.c.l.b16 %v167
    %v204 = vpack.c.b16 %v189, %v188
    %v205 = vpack.c.b16 %v191, %v190
    %v206 = vpack.c.b16 %v193, %v192
    %v207 = vpack.c.b16 %v195, %v194
    %v208 = vpack.c.b16 %v197, %v196
    %v209 = vpack.c.b16 %v199, %v198
    %v210 = vpack.c.b16 %v201, %v200
    %v211 = vpack.c.b16 %v203, %v202
    %220 = vmatprep.subr.bf16.mxu0 0
    %221 = vmatpush1.bf16.msra.mxu0 %v211
    %222 = vmatprep.subr.bf16.mxu0 0
    %223 = vmatpush1.bf16.msra.mxu0 %v210
    %224 = vmatprep.subr.bf16.mxu0 0
    %225 = vmatpush1.bf16.msra.mxu0 %v209
    %226 = vmatprep.subr.bf16.mxu0 0
    %227 = vmatpush1.bf16.msra.mxu0 %v208
    %228 = vmatprep.subr.bf16.mxu0 0
    %229 = vmatpush1.bf16.msra.mxu0 %v207
    %230 = vmatprep.subr.bf16.mxu0 0
    %231 = vmatpush1.bf16.msra.mxu0 %v206
    %232 = vmatprep.subr.bf16.mxu0 0
    %233 = vmatpush1.bf16.msra.mxu0 %v205
    %234 = vmatprep.subr.bf16.mxu0 0
    %235 = vmatpush1.bf16.msra.mxu0 %v204
    %236 = vmatprep.subr.bf16.mxu0 0
    %237 = vmatpush2.bf16.msra.mxu0 0
    %238 = vmatprep.subr.bf16.mxu0 0
    %239 = vmatpush2.bf16.msra.mxu0 0
    %240 = vmatprep.subr.bf16.mxu0 0
    %241 = vmatpush2.bf16.msra.mxu0 0
    %242 = vmatprep.subr.bf16.mxu0 0
    %243 = vmatpush2.bf16.msra.mxu0 0
    %244 = vmatprep.subr.bf16.mxu0 0
    %245 = vmatpush2.bf16.msra.mxu0 0
    %246 = vmatprep.subr.bf16.mxu0 0
    %247 = vmatpush2.bf16.msra.mxu0 0
    %248 = vmatprep.subr.bf16.mxu0 0
    %249 = vmatpush2.bf16.msra.mxu0 0
    %250 = vmatprep.subr.bf16.mxu0 0
    %251 = vmatpush2.bf16.msra.mxu0 0
    %252 = vmatprep.mubr.bf16.mxu0 0
    %253 = vmatmul.mubr.bf16.gmra.mxu0 %v151
    %v254 = vpop.f32.mrf.mxu0
    %v255 = vadd.f32 %v171, %v254
    %v256 = vpop.f32.mrf.mxu0
    %v257 = vpop.f32.mrf.mxu0
    %v258 = vadd.f32 %v171, %v257
    %v259 = vpop.f32.mrf.mxu0
    %260 = vdwg.mxu0
    %v261 = vmax.f32 %v255, 0.0
    %v262 = vmax.f32 %v258, 0.0
    %v263 = vpack.c.bf16 %v262, %v261
    %v264 = vld [vmem:[#allocation7] sm:$0xf]
    %v265 = vld [vmem:[#allocation7 + $0x4] sm:$0xf]
    %v266 = vld [vmem:[#allocation7 + $0x8] sm:$0xf]
    %v267 = vld [vmem:[#allocation7 + $0xc] sm:$0xf]
    %v268 = vld [vmem:[#allocation7 + $0x10] sm:$0xf]
    %v269 = vld [vmem:[#allocation7 + $0x14] sm:$0xf]
    %v270 = vld [vmem:[#allocation7 + $0x18] sm:$0xf]
    %v271 = vld [vmem:[#allocation7 + $0x1c] sm:$0xf]
    %v272 = vld [vmem:[#allocation7 + $0x20] sm:$0xf]
    %v273 = vld [vmem:[#allocation7 + $0x24] sm:$0xf]
    %v274 = vld [vmem:[#allocation7 + $0x28] sm:$0xf]
    %v275 = vld [vmem:[#allocation7 + $0x2c] sm:$0xf]
    %v276 = vld [vmem:[#allocation7 + $0x30] sm:$0xf]
    %v277 = vld [vmem:[#allocation7 + $0x34] sm:$0xf]
    %v278 = vld [vmem:[#allocation7 + $0x38] sm:$0xf]
    %v279 = vld [vmem:[#allocation7 + $0x3c] sm:$0xf]
    %v296 = vunpack.c.l.b16 %v264
    %v297 = vunpack.c.l.b16 %v265
    %v298 = vunpack.c.l.b16 %v266
    %v299 = vunpack.c.l.b16 %v267
    %v300 = vunpack.c.l.b16 %v268
    %v301 = vunpack.c.l.b16 %v269
    %v302 = vunpack.c.l.b16 %v270
    %v303 = vunpack.c.l.b16 %v271
    %v304 = vunpack.c.l.b16 %v272
    %v305 = vunpack.c.l.b16 %v273
    %v306 = vunpack.c.l.b16 %v274
    %v307 = vunpack.c.l.b16 %v275
    %v308 = vunpack.c.l.b16 %v276
    %v309 = vunpack.c.l.b16 %v277
    %v310 = vunpack.c.l.b16 %v278
    %v311 = vunpack.c.l.b16 %v279
    %v312 = vpack.c.b16 %v297, %v296
    %v313 = vpack.c.b16 %v299, %v298
    %v314 = vpack.c.b16 %v301, %v300
    %v315 = vpack.c.b16 %v303, %v302
    %v316 = vpack.c.b16 %v305, %v304
    %v317 = vpack.c.b16 %v307, %v306
    %v318 = vpack.c.b16 %v309, %v308
    %v319 = vpack.c.b16 %v311, %v310
    %328 = vmatprep.subr.bf16.mxu0 0
    %329 = vmatpush1.bf16.msra.mxu0 %v319
    %330 = vmatprep.subr.bf16.mxu0 0
    %331 = vmatpush1.bf16.msra.mxu0 %v318
    %332 = vmatprep.subr.bf16.mxu0 0
    %333 = vmatpush1.bf16.msra.mxu0 %v317
    %334 = vmatprep.subr.bf16.mxu0 0
    %335 = vmatpush1.bf16.msra.mxu0 %v316
    %336 = vmatprep.subr.bf16.mxu0 0
    %337 = vmatpush1.bf16.msra.mxu0 %v315
    %338 = vmatprep.subr.bf16.mxu0 0
    %339 = vmatpush1.bf16.msra.mxu0 %v314
    %340 = vmatprep.subr.bf16.mxu0 0
    %341 = vmatpush1.bf16.msra.mxu0 %v313
    %342 = vmatprep.subr.bf16.mxu0 0
    %343 = vmatpush1.bf16.msra.mxu0 %v312
    %344 = vmatprep.subr.bf16.mxu0 0
    %345 = vmatpush2.bf16.msra.mxu0 0
    %346 = vmatprep.subr.bf16.mxu0 0
    %347 = vmatpush2.bf16.msra.mxu0 0
    %348 = vmatprep.subr.bf16.mxu0 0
    %349 = vmatpush2.bf16.msra.mxu0 0
    %350 = vmatprep.subr.bf16.mxu0 0
    %351 = vmatpush2.bf16.msra.mxu0 0
    %352 = vmatprep.subr.bf16.mxu0 0
    %353 = vmatpush2.bf16.msra.mxu0 0
    %354 = vmatprep.subr.bf16.mxu0 0
    %355 = vmatpush2.bf16.msra.mxu0 0
    %356 = vmatprep.subr.bf16.mxu0 0
    %357 = vmatpush2.bf16.msra.mxu0 0
    %358 = vmatprep.subr.bf16.mxu0 0
    %359 = vmatpush2.bf16.msra.mxu0 0
    %360 = vmatprep.mubr.bf16.mxu0 0
    %361 = vmatmul.mubr.bf16.gmra.mxu0 %v263
    %v362 = vpop.f32.mrf.mxu0
    %v363 = vadd.f32 0.0, %v362
    %v364 = vpop.f32.mrf.mxu0
    %v365 = vpop.f32.mrf.mxu0
    %v366 = vadd.f32 0.0, %v365
    %v367 = vpop.f32.mrf.mxu0
    %368 = vdwg.mxu0
    %v369 = vlaneseq
    %v370 = vshrl.u32 %v369, 7
    %v371 = vsub.s32 2, %v370
    %v372 = vrot.slane %v76, %v371
    %v373 = vadd.f32 %v363, %v372
    %v374 = vadd.f32 %v366, %v372
    %vm375 = vcmask 15360
    %376 = vst.msk [vmem:[%s5] sm:$0xff] %vm375, %v373
    %377 = vst.msk [vmem:[%s5 + $0x8] sm:$0xff] %vm375, %v374
    // Predicated region
    $region38: #{tpu_custom_call.1} parent=1 // pred_check
      _
    $region39: #{tpu_custom_call.1} parent=1 // pred_check_branch
      %379 = sbr.rel (0) target = $region41
    $region40: #{tpu_custom_call.1} parent=1 // pred_region
      _
    $region41: #{tpu_custom_call.1} parent=1 // pred_fallthru
      _
    // Predicated region
    $region42: #{tpu_custom_call.1} parent=1 // pred_check
      _
    $region43: #{tpu_custom_call.1} parent=1 // pred_check_branch
      %381 = sbr.rel (0) target = $region45
    $region44: #{tpu_custom_call.1} parent=1 // pred_region
      _
    $region45: #{tpu_custom_call.1} parent=1 // pred_fallthru
      _
    %382 = vsyncpa [#allocation3], 1
    %383 = vsyncpa [#allocation5], 1
    %384 = vsyncpa [#allocation8], 1

</llo_original>
